<compile_context>
chip_gen: v5e
topology: v5e:2x2
jax: 0.10.0
libtpu: 0.0.40
codegen_flags: <defaults>
</compile_context>

<pallas_src>
import functools

import jax
import jax.numpy as jnp
from jax.experimental import pallas as pl
from jax.experimental.pallas import tpu as pltpu


# ----------------------------- helpers ------------------------------------ #
def _round_up(x, m):
    return (x + m - 1) // m * m


def _tile_config():
    """Per-generation (tm_max, tn_max, tk_max, multi_tensorcore)."""
    try:
        kind = jax.devices()[0].device_kind.lower()
    except Exception:  # pragma: no cover - defensive
        kind = ""
    if "v5" in kind:
        # v5e: 4x128^2 MXU, lowest HBM BW -> bigger M tile, 128-wide N tile.
        return 256, 128, 512, False
    if "v7" in kind:
        # v7x: 2 TensorCores/chip.  Working set is only a few MiB, so full
        # size K tiles fit comfortably under the 32 MiB scoped VMEM default.
        return 512, 256, 1024, True
    # v6e (and default): 256x256 MXU, huge VMEM headroom.
    return 512, 256, 1024, False


# ----------------------------- Pallas kernel ------------------------------ #
def _fused_kernel(*refs, apply_relu, has_residual):
    """K-tiled matmul:
         k == 0      : acc = x@w + bias        (no zero-init store/reload)
         k  > 0      : acc += x@w
         k == last   : (+ f32 identity residual) -> optional ReLU -> store."""
    x_ref, w_ref, b_ref = refs[0], refs[1], refs[2]
    pos = 3
    res_ref = None
    if has_residual:
        res_ref = refs[pos]
        pos += 1
    o_ref = refs[pos]
    acc_ref = refs[pos + 1]

    k = pl.program_id(2)
    nk = pl.num_programs(2)

    contrib = jnp.dot(x_ref[...], w_ref[...],
                      preferred_element_type=jnp.float32)

    @pl.when(k == 0)
    def _init():
        acc_ref[...] = contrib + b_ref[...]           # folded-BN bias

    @pl.when(k > 0)
    def _accumulate():
        acc_ref[...] += contrib

    @pl.when(k == nk - 1)
    def _finalize():
        out = acc_ref[...]
        if has_residual:                              # identity shortcut (f32)
            out = out + res_ref[...]
        if apply_relu:
            out = jnp.maximum(out, 0.0)
        o_ref[...] = out.astype(o_ref.dtype)


def fused_conv_matmul(patches, w_mat, bias, *, residual=None, apply_relu=True,
                      out_dtype=jnp.bfloat16, compute_dtype=jnp.bfloat16):
    """patches:[M,K], w_mat:[K,Cout] (BN scale folded), bias:[1,Cout] f32,
    residual:[M,Cout] (added in f32) or None.  Returns [M, Cout] out_dtype."""
    M, K = patches.shape
    Cout = w_mat.shape[1]
    tm_max, tn_max, tk_max, multi_tc = _tile_config()

    # --- N (output channel) tiling: lane-dense stores, no silent tn=128 drop
    Np_128 = _round_up(Cout, 128)
    Np_tn = _round_up(Cout, tn_max)
    if Np_tn * 3 <= Np_128 * 4:          # <= 33% padding waste -> big N tile
        Np, tn = Np_tn, tn_max
    else:
        Np, tn = Np_128, 128
        cand = (min(tn_max, Np_128) // 128) * 128
        while cand >= 128:
            if Np % cand == 0:
                tn = cand
                break
            cand -= 128

    # --- M tiling (16-row rounding: bf16 sublane packing) ---
    tm = tm_max if M >= tm_max else _round_up(M, 16)
    Mp = _round_up(M, tm)
    if multi_tc:
        # v7x has 2 TensorCores: guarantee >= 2 parallel tiles.
        while (Mp // tm) * (Np // tn) < 2 and tm > 16:
            tm = max(16, _round_up(tm // 2, 16))
            Mp = _round_up(M, tm)

    # --- K tiling ---
    Kp = _round_up(K, 128)
    if Kp <= tk_max:
        tk = Kp
    else:
        nk = -(-Kp // tk_max)
        tk = _round_up(-(-Kp // nk), 128)
        Kp = tk * nk
    nk = Kp // tk
    gm, gn = Mp // tm, Np // tn

    # --- pad operands (zero padding is mathematically inert; for real ResNet
    #     shapes with 128-aligned channels these pads are zero-width no-ops) --
    x = jnp.pad(patches.astype(compute_dtype), ((0, Mp - M), (0, Kp - K)))
    w = jnp.pad(w_mat.astype(compute_dtype), ((0, Kp - K), (0, Np - Cout)))
    b = jnp.pad(jnp.reshape(bias, (1, -1)).astype(jnp.float32),
                ((0, 0), (0, Np - Cout)))

    in_specs = [
        pl.BlockSpec((tm, tk), lambda i, j, k: (i, k)),   # patch tile
        pl.BlockSpec((tk, tn), lambda i, j, k: (k, j)),   # weight tile
        pl.BlockSpec((1, tn), lambda i, j, k: (0, j)),    # bias (BN folded)
    ]
    args = [x, w, b]

    bpe = jnp.dtype(compute_dtype).itemsize
    out_bpe = jnp.dtype(out_dtype).itemsize
    flops = 2 * Mp * Kp * Np
    # Account for weight re-reads across M tiles and patch re-reads across
    # Cout tiles (advisory only).
    bytes_accessed = (gn * Mp * Kp * bpe + gm * Kp * Np * bpe
                      + Np * 4 + Mp * Np * out_bpe)

    if residual is not None:
        r = jnp.pad(residual.astype(jnp.float32),
                    ((0, Mp - M), (0, Np - Cout)))
        in_specs.append(pl.BlockSpec((tm, tn), lambda i, j, k: (i, j)))
        args.append(r)
        bytes_accessed += Mp * Np * 4

    kernel = functools.partial(_fused_kernel, apply_relu=apply_relu,
                               has_residual=residual is not None)

    out = pl.pallas_call(
        kernel,
        out_shape=jax.ShapeDtypeStruct((Mp, Np), out_dtype),
        grid=(gm, gn, nk),
        in_specs=in_specs,
        out_specs=pl.BlockSpec((tm, tn), lambda i, j, k: (i, j)),
        scratch_shapes=[pltpu.VMEM((tm, tn), jnp.float32)],
        compiler_params=pltpu.CompilerParams(
            dimension_semantics=("parallel", "parallel", "arbitrary"),
            vmem_limit_bytes=32 * 1024 * 1024),
        cost_estimate=pl.CostEstimate(flops=int(flops), transcendentals=0,
                                      bytes_accessed=int(bytes_accessed)),
    )(*args)
    # When Cout % 128 == 0 (real ResNet stages) the channel slice is a no-op.
    return out[:M, :Cout]


# ------------------------------ JAX glue ----------------------------------- #
def im2col_3x3(x, stride, extra=None):
    """x: [N,H,W,C] -> patches [N*Ho*Wo, 9*C (+Ce)] ordered (kh, kw, cin).
    `extra` ([N,Ho,Wo,Ce]) rides the same concat as extra K columns (used to
    fuse the 1x1 downsample shortcut input without a separate HBM pass)."""
    N, H, W, C = x.shape
    xp = jnp.pad(x, ((0, 0), (1, 1), (1, 1), (0, 0)))
    Ho = (H + 2 - 3) // stride + 1
    Wo = (W + 2 - 3) // stride + 1
    cols = []
    for dh in range(3):
        for dw in range(3):
            cols.append(xp[:, dh:dh + (Ho - 1) * stride + 1:stride,
                              dw:dw + (Wo - 1) * stride + 1:stride, :])
    if extra is not None:
        cols.append(extra.astype(x.dtype))
    patches = jnp.concatenate(cols, axis=-1)
    return patches.reshape(N * Ho * Wo, -1), (N, Ho, Wo)


def fold_bn(gamma, beta, mean, var, eps=1e-5):
    scale = gamma / jnp.sqrt(var + eps)
    bias = beta - mean * scale
    return scale.reshape(1, -1), bias.reshape(1, -1)


def conv3x3_weight_to_mat(w_oihw):
    """PyTorch [O,I,3,3] -> [9*I, O] matching the (kh, kw, cin) patch order."""
    return jnp.transpose(w_oihw, (2, 3, 1, 0)).reshape(-1, w_oihw.shape[0])


def basic_block_forward(x_nhwc, params, stride, compute_dtype=jnp.bfloat16):
    """BasicBlock forward in NHWC. x: [N,H,W,Cin] -> [N,Ho,Wo,planes] (f32)."""
    N, H, W, Cin = x_nhwc.shape
    planes = params["w1"].shape[0]
    x_c = x_nhwc.astype(compute_dtype)

    # conv1 -> bn1 -> relu   (BN scale folded into weight columns, f32 fold)
    s1, b1 = fold_bn(params["bn1_g"], params["bn1_b"],
                     params["bn1_m"], params["bn1_v"])
    w1 = conv3x3_weight_to_mat(params["w1"]) * s1
    p1, (n, ho, wo) = im2col_3x3(x_c, stride)
    y1 = fused_conv_matmul(p1, w1, b1, apply_relu=True,
                           out_dtype=compute_dtype, compute_dtype=compute_dtype)
    y1_img = y1.reshape(n, ho, wo, planes)

    # conv2 -> bn2 -> (+ shortcut) -> relu, fused into ONE kernel call.
    s2, b2 = fold_bn(params["bn2_g"], params["bn2_b"],
                     params["bn2_m"], params["bn2_v"])
    w2 = conv3x3_weight_to_mat(params["w2"]) * s2

    if stride != 1 or Cin != planes:
        # 1x1 downsample shortcut folded into the K reduction: strided input
        # appended to the im2col concat, its weight concatenated along K.
        ssc, bsc = fold_bn(params["bnsc_g"], params["bnsc_b"],
                           params["bnsc_m"], params["bnsc_v"])
        wsc = jnp.transpose(params["wsc"][:, :, 0, 0], (1, 0)) * ssc  # [Cin,planes]
        xs_img = x_c[:, ::stride, ::stride, :]                         # [N,Ho,Wo,Cin]
        p2, _ = im2col_3x3(y1_img, 1, extra=xs_img)
        w_full = jnp.concatenate([w2, wsc], axis=0)
        y2 = fused_conv_matmul(p2, w_full, b2 + bsc, apply_relu=True,
                               out_dtype=compute_dtype,
                               compute_dtype=compute_dtype)
    else:
        # Identity shortcut: passed through and added in f32 inside the kernel.
        p2, _ = im2col_3x3(y1_img, 1)
        res = x_nhwc.astype(jnp.float32).reshape(n * ho * wo, Cin)
        y2 = fused_conv_matmul(p2, w2, b2, residual=res, apply_relu=True,
                               out_dtype=compute_dtype,
                               compute_dtype=compute_dtype)

    return y2.reshape(n, ho, wo, planes).astype(jnp.float32)


# ------------------------- pure-JAX reference ------------------------------ #
def _conv_nhwc(x, w_oihw, stride, pad):
    w_hwio = jnp.transpose(w_oihw, (2, 3, 1, 0))
    return jax.lax.conv_general_dilated(
        x, w_hwio, window_strides=(stride, stride),
        padding=[(pad, pad), (pad, pad)],
        dimension_numbers=("NHWC", "HWIO", "NHWC"))


def _bn_ref(x, g, b, m, v, eps=1e-5):
    return (x - m) / jnp.sqrt(v + eps) * g + b


def basic_block_reference(x_nhwc, params, stride):
    out = jax.nn.relu(_bn_ref(_conv_nhwc(x_nhwc, params["w1"], stride, 1),
                              params["bn1_g"], params["bn1_b"],
                              params["bn1_m"], params["bn1_v"]))
    out = _bn_ref(_conv_nhwc(out, params["w2"], 1, 1),
                  params["bn2_g"], params["bn2_b"],
                  params["bn2_m"], params["bn2_v"])
    Cin, planes = x_nhwc.shape[-1], params["w1"].shape[0]
    if stride != 1 or Cin != planes:
        sc = _bn_ref(_conv_nhwc(x_nhwc, params["wsc"], stride, 0),
                     params["bnsc_g"], params["bnsc_b"],
                     params["bnsc_m"], params["bnsc_v"])
    else:
        sc = x_nhwc
    return jax.nn.relu(out + sc)


# ----------------------------- param init ---------------------------------- #
def init_params(key, in_planes, planes, stride):
    ks = jax.random.split(key, 8)

    def bn(k, c):
        k1, k2, k3, k4 = jax.random.split(k, 4)
        return (1.0 + 0.1 * jax.random.normal(k1, (c,), jnp.float32),   # gamma
                0.1 * jax.random.normal(k2, (c,), jnp.float32),         # beta
                0.05 * jax.random.normal(k3, (c,), jnp.float32),        # running_mean
                jnp.abs(1.0 + 0.1 * jax.random.normal(k4, (c,), jnp.float32)))  # var

    p = {}
    p["w1"] = 0.2 * jax.random.normal(ks[0], (planes, in_planes, 3, 3), jnp.float32)
    p["bn1_g"], p["bn1_b"], p["bn1_m"], p["bn1_v"] = bn(ks[1], planes)
    p["w2"] = 0.2 * jax.random.normal(ks[2], (planes, planes, 3, 3), jnp.float32)
    p["bn2_g"], p["bn2_b"], p["bn2_m"], p["bn2_v"] = bn(ks[3], planes)
    if stride != 1 or in_planes != planes:
        p["wsc"] = 0.2 * jax.random.normal(ks[4], (planes, in_planes, 1, 1), jnp.float32)
        p["bnsc_g"], p["bnsc_b"], p["bnsc_m"], p["bnsc_v"] = bn(ks[5], planes)
    return p


# --------------------------------- main ------------------------------------ #
if __name__ == "__main__":
    key = jax.random.PRNGKey(0)
    kx, kp1, kp2 = jax.random.split(key, 3)

    # NCHW input (PyTorch convention), transposed to NHWC for the kernel.
    x_nchw = jax.random.normal(kx, (2, 4, 16, 16), jnp.float32)
    x_nhwc = jnp.transpose(x_nchw, (0, 2, 3, 1))

    # Case 1: downsampling block (stride=2, in_planes=4 -> planes=8, fused 1x1 shortcut)
    params_ds = init_params(kp1, in_planes=4, planes=8, stride=2)
    # Case 2: identity-shortcut block (stride=1, in_planes == planes == 4)
    params_id = init_params(kp2, in_planes=4, planes=4, stride=1)

    # Performance path: bf16 matmul operands, bf16 outputs, f32 accumulation.
    fwd_ds = jax.jit(functools.partial(basic_block_forward, stride=2))
    fwd_id = jax.jit(functools.partial(basic_block_forward, stride=1))
    out_ds = fwd_ds(x_nhwc, params_ds)
    out_id = fwd_id(x_nhwc, params_id)
    jax.block_until_ready((out_ds, out_id))

    ref_ds = basic_block_reference(x_nhwc, params_ds, stride=2)
    ref_id = basic_block_reference(x_nhwc, params_id, stride=1)

    # Validation path: f32 operands / f32 intermediates -> tighter tolerance
    # (catches a wrong BN fold or bias/shortcut merge on these tiny shapes).
    fwd_ds32 = jax.jit(functools.partial(basic_block_forward, stride=2,
                                         compute_dtype=jnp.float32))
    fwd_id32 = jax.jit(functools.partial(basic_block_forward, stride=1,
                                         compute_dtype=jnp.float32))
    out_ds32 = fwd_ds32(x_nhwc, params_ds)
    out_id32 = fwd_id32(x_nhwc, params_id)
    jax.block_until_ready((out_ds32, out_id32))

    assert out_ds.shape == (2, 8, 8, 8), out_ds.shape
    assert out_id.shape == (2, 16, 16, 4), out_id.shape

    assert jnp.allclose(out_ds32, ref_ds, atol=5e-2, rtol=5e-2), \
        float(jnp.max(jnp.abs(out_ds32 - ref_ds)))
    assert jnp.allclose(out_id32, ref_id, atol=5e-2, rtol=5e-2), \
        float(jnp.max(jnp.abs(out_id32 - ref_id)))
    # bf16 operands / bf16 intermediates -> bf16-appropriate tolerance.
    assert jnp.allclose(out_ds, ref_ds, atol=1e-1, rtol=1e-1), \
        float(jnp.max(jnp.abs(out_ds - ref_ds)))
    assert jnp.allclose(out_id, ref_id, atol=1e-1, rtol=1e-1), \
        float(jnp.max(jnp.abs(out_id - ref_id)))

    print("KERNEL_OK")
</pallas_src>

<mosaic_0001>
module attributes {stable_mosaic.version = 11 : i64} {
  func.func @_fused_kernel(%arg0: i32, %arg1: i32, %arg2: i32, %arg3: memref<128x128xbf16, #tpu.memory_space<vmem>>, %arg4: memref<128x128xbf16, #tpu.memory_space<vmem>>, %arg5: memref<1x128xf32, #tpu.memory_space<vmem>>, %arg6: memref<128x128xbf16, #tpu.memory_space<vmem>>, %arg7: memref<128x128xf32, #tpu.memory_space<vmem>>) attributes {dimension_semantics = [#tpu.dimension_semantics<parallel>, #tpu.dimension_semantics<parallel>, #tpu.dimension_semantics<arbitrary>], iteration_bounds = array<i64: 1, 1, 1>, scalar_prefetch = 0 : i64, scratch_operands = 1 : i64, tpu.core_type = #tpu.core_type<tc>, window_params = [{transform_indices = @transform_0, window_bounds = array<i64: 128, 128>}, {transform_indices = @transform_1, window_bounds = array<i64: 128, 128>}, {transform_indices = @transform_2, window_bounds = array<i64: 1, 128>}, {transform_indices = @transform_3, window_bounds = array<i64: 128, 128>}]} {
    %c0 = arith.constant 0 : index
    %c0_0 = arith.constant 0 : index
    %0 = vector.load %arg3[%c0, %c0_0] : memref<128x128xbf16, #tpu.memory_space<vmem>>, vector<128x128xbf16>
    %c0_1 = arith.constant 0 : index
    %c0_2 = arith.constant 0 : index
    %1 = vector.load %arg4[%c0_1, %c0_2] : memref<128x128xbf16, #tpu.memory_space<vmem>>, vector<128x128xbf16>
    %cst = arith.constant dense<0.000000e+00> : vector<128x128xf32>
    %2 = tpu.matmul %0, %1, %cst {dimension_numbers = #tpu.dot_dimension_numbers<[1], [0], [0], [1], [0, 0, 1, 1], [], []>} : vector<128x128xbf16>, vector<128x128xbf16>, vector<128x128xf32> -> vector<128x128xf32>
    %c0_i32 = arith.constant 0 : i32
    %3 = arith.cmpi eq, %arg2, %c0_i32 : i32
    %4 = arith.extui %3 : i1 to i32
    %c0_i32_3 = arith.constant 0 : i32
    %5 = arith.cmpi ne, %4, %c0_i32_3 : i32
    scf.if %5 {
      %c0_8 = arith.constant 0 : index
      %c0_9 = arith.constant 0 : index
      %12 = vector.load %arg5[%c0_8, %c0_9] : memref<1x128xf32, #tpu.memory_space<vmem>>, vector<1x128xf32>
      %13 = vector.broadcast %12 : vector<1x128xf32> to vector<128x128xf32>
      %14 = arith.addf %2, %13 : vector<128x128xf32>
      %c0_10 = arith.constant 0 : index
      %c0_11 = arith.constant 0 : index
      %15 = vector.load %arg7[%c0_10, %c0_11] : memref<128x128xf32, #tpu.memory_space<vmem>>, vector<128x128xf32>
      tpu.vector_store %arg7[%c0_10, %c0_11], %14 {strides = array<i32>} : memref<128x128xf32, #tpu.memory_space<vmem>>, vector<128x128xf32>,
    } else {
    }
    %c0_i32_4 = arith.constant 0 : i32
    %6 = arith.cmpi sgt, %arg2, %c0_i32_4 : i32
    %7 = arith.extui %6 : i1 to i32
    %c0_i32_5 = arith.constant 0 : i32
    %8 = arith.cmpi ne, %7, %c0_i32_5 : i32
    scf.if %8 {
      %c0_8 = arith.constant 0 : index
      %c0_9 = arith.constant 0 : index
      %12 = vector.load %arg7[%c0_8, %c0_9] : memref<128x128xf32, #tpu.memory_space<vmem>>, vector<128x128xf32>
      %13 = arith.addf %12, %2 : vector<128x128xf32>
      %c0_10 = arith.constant 0 : index
      %c0_11 = arith.constant 0 : index
      %14 = vector.load %arg7[%c0_10, %c0_11] : memref<128x128xf32, #tpu.memory_space<vmem>>, vector<128x128xf32>
      tpu.vector_store %arg7[%c0_10, %c0_11], %13 {strides = array<i32>} : memref<128x128xf32, #tpu.memory_space<vmem>>, vector<128x128xf32>,
    } else {
    }
    %c0_i32_6 = arith.constant 0 : i32
    %9 = arith.cmpi eq, %arg2, %c0_i32_6 : i32
    %10 = arith.extui %9 : i1 to i32
    %c0_i32_7 = arith.constant 0 : i32
    %11 = arith.cmpi ne, %10, %c0_i32_7 : i32
    scf.if %11 {
      %c0_8 = arith.constant 0 : index
      %c0_9 = arith.constant 0 : index
      %12 = vector.load %arg7[%c0_8, %c0_9] : memref<128x128xf32, #tpu.memory_space<vmem>>, vector<128x128xf32>
      %cst_10 = arith.constant 0.000000e+00 : f32
      %13 = vector.broadcast %cst_10 : f32 to vector<128x128xf32>
      %14 = arith.maximumf %12, %13 : vector<128x128xf32>
      %15 = arith.truncf %14 : vector<128x128xf32> to vector<128x128xbf16>
      %c0_11 = arith.constant 0 : index
      %c0_12 = arith.constant 0 : index
      %16 = vector.load %arg6[%c0_11, %c0_12] : memref<128x128xbf16, #tpu.memory_space<vmem>>, vector<128x128xbf16>
      tpu.vector_store %arg6[%c0_11, %c0_12], %15 {strides = array<i32>} : memref<128x128xbf16, #tpu.memory_space<vmem>>, vector<128x128xbf16>,
    } else {
    }
    return
  }
  func.func @transform_0(%arg0: i32, %arg1: i32, %arg2: i32) -> (i32, i32) {
    %c0_i32 = arith.constant 0 : i32
    return %arg0, %arg2 : i32, i32
  }
  func.func @transform_1(%arg0: i32, %arg1: i32, %arg2: i32) -> (i32, i32) {
    %c0_i32 = arith.constant 0 : i32
    return %arg2, %arg1 : i32, i32
  }
  func.func @transform_2(%arg0: i32, %arg1: i32, %arg2: i32) -> (i32, i32) {
    %c0_i32 = arith.constant 0 : i32
    %c0_i32_0 = arith.constant 0 : i32
    return %c0_i32, %arg1 : i32, i32
  }
  func.func @transform_3(%arg0: i32, %arg1: i32, %arg2: i32) -> (i32, i32) {
    %c0_i32 = arith.constant 0 : i32
    return %arg0, %arg1 : i32, i32
  }
}

</mosaic_0001>

<llo_original>
// kernel: basic_block_forward.2
$region0: #{basic_block_forward.2}
  #allocation0 [shape = 'u32[]', space=smem, size = 0x4, offset = 0x4, fixed_abs, tag = 'smem constant byte address 0x4 - core index']
  #allocation1 [shape = 'u32[72,128]{1,0:T(1,128)}', space=vmem, size = 0x9000, scoped, tag = 'internal scratch']
  #allocation2 [shape = 'f32[128,128]{1,0:T(8,128)}', space=vmem, size = 0x10000, scoped, tag = 'scratch operand']
  %s0 = inlined_call_operand.vmem [shape: bf16[128,128], index: 0, kind: input, shape index: {}]
  %s1 = inlined_call_operand.vmem [shape: bf16[128,128], index: 1, kind: input, shape index: {}]
  %s2 = inlined_call_operand.vmem [shape: f32[1,128], index: 2, kind: input, shape index: {}]
  %s3 = inlined_call_operand.vmem [shape: bf16[128,128], index: 3, kind: output, shape index: {}]
  %s4 = sld [smem:[#allocation0]]
  $region34: #{basic_block_forward.2} parent=0
    _
  %s6 = ssub.s32 1, %s4
  %s7 = scalar_select 0, %s6, %s4
  // Predicated region
  $region2: #{basic_block_forward.2} parent=0 // pred_check
    _
  $region3: #{basic_block_forward.2} parent=0 // pred_check_branch
    %9 = sbr.rel (0) target = $region5
  $region4: #{basic_block_forward.2} parent=0 // pred_region
    _
  $region5: #{basic_block_forward.2} parent=0 // pred_fallthru
    _
  // Predicated region
  $region6: #{basic_block_forward.2} parent=0 // pred_check
    _
  $region7: #{basic_block_forward.2} parent=0 // pred_check_branch
    %11 = sbr.rel (0) target = $region9
  $region8: #{basic_block_forward.2} parent=0 // pred_region
    _
  $region9: #{basic_block_forward.2} parent=0 // pred_fallthru
    _
  // Predicated region
  $region10: #{basic_block_forward.2} parent=0 // pred_check
    _
  $region11: #{basic_block_forward.2} parent=0 // pred_check_branch
    %13 = sbr.rel (0) target = $region13
  $region12: #{basic_block_forward.2} parent=0 // pred_region
    _
  $region13: #{basic_block_forward.2} parent=0 // pred_fallthru
    _
  %v14 = vld [vmem:[%s0] sm:$0xf]
  %v15 = vld [vmem:[%s0 + $0x4] sm:$0xf]
  %v16 = vld [vmem:[%s0 + $0x8] sm:$0xf]
  %v17 = vld [vmem:[%s0 + $0xc] sm:$0xf]
  %v18 = vld [vmem:[%s0 + $0x10] sm:$0xf]
  %v19 = vld [vmem:[%s0 + $0x14] sm:$0xf]
  %v20 = vld [vmem:[%s0 + $0x18] sm:$0xf]
  %v21 = vld [vmem:[%s0 + $0x1c] sm:$0xf]
  %v22 = vld [vmem:[%s0 + $0x20] sm:$0xf]
  %v23 = vld [vmem:[%s0 + $0x24] sm:$0xf]
  %v24 = vld [vmem:[%s0 + $0x28] sm:$0xf]
  %v25 = vld [vmem:[%s0 + $0x2c] sm:$0xf]
  %v26 = vld [vmem:[%s0 + $0x30] sm:$0xf]
  %v27 = vld [vmem:[%s0 + $0x34] sm:$0xf]
  %v28 = vld [vmem:[%s0 + $0x38] sm:$0xf]
  %v29 = vld [vmem:[%s0 + $0x3c] sm:$0xf]
  %v30 = vld [vmem:[%s1] sm:$0xf]
  %v31 = vld [vmem:[%s1 + $0x4] sm:$0xf]
  %v32 = vld [vmem:[%s1 + $0x8] sm:$0xf]
  %v33 = vld [vmem:[%s1 + $0xc] sm:$0xf]
  %v34 = vld [vmem:[%s1 + $0x10] sm:$0xf]
  %v35 = vld [vmem:[%s1 + $0x14] sm:$0xf]
  %v36 = vld [vmem:[%s1 + $0x18] sm:$0xf]
  %v37 = vld [vmem:[%s1 + $0x1c] sm:$0xf]
  %v38 = vld [vmem:[%s1 + $0x20] sm:$0xf]
  %v39 = vld [vmem:[%s1 + $0x24] sm:$0xf]
  %v40 = vld [vmem:[%s1 + $0x28] sm:$0xf]
  %v41 = vld [vmem:[%s1 + $0x2c] sm:$0xf]
  %v42 = vld [vmem:[%s1 + $0x30] sm:$0xf]
  %v43 = vld [vmem:[%s1 + $0x34] sm:$0xf]
  %v44 = vld [vmem:[%s1 + $0x38] sm:$0xf]
  %v45 = vld [vmem:[%s1 + $0x3c] sm:$0xf]
  %v62 = vunpack.c.l.b16 %v14
  %v63 = vunpack.c.l.b16 %v15
  %v64 = vunpack.c.l.b16 %v16
  %v65 = vunpack.c.l.b16 %v17
  %v66 = vunpack.c.l.b16 %v18
  %v67 = vunpack.c.l.b16 %v19
  %v68 = vunpack.c.l.b16 %v20
  %v69 = vunpack.c.l.b16 %v21
  %v70 = vunpack.c.l.b16 %v22
  %v71 = vunpack.c.l.b16 %v23
  %v72 = vunpack.c.l.b16 %v24
  %v73 = vunpack.c.l.b16 %v25
  %v74 = vunpack.c.l.b16 %v26
  %v75 = vunpack.c.l.b16 %v27
  %v76 = vunpack.c.l.b16 %v28
  %v77 = vunpack.c.l.b16 %v29
  %v78 = vpack.c.b16 %v63, %v62
  %v79 = vpack.c.b16 %v65, %v64
  %v80 = vpack.c.b16 %v67, %v66
  %v81 = vpack.c.b16 %v69, %v68
  %v82 = vpack.c.b16 %v71, %v70
  %v83 = vpack.c.b16 %v73, %v72
  %v84 = vpack.c.b16 %v75, %v74
  %v85 = vpack.c.b16 %v77, %v76
  %v110 = vunpack.c.l.b16 %v30
  %v111 = vunpack.c.l.b16 %v31
  %v112 = vunpack.c.l.b16 %v32
  %v113 = vunpack.c.l.b16 %v33
  %v114 = vunpack.c.l.b16 %v34
  %v115 = vunpack.c.l.b16 %v35
  %v116 = vunpack.c.l.b16 %v36
  %v117 = vunpack.c.l.b16 %v37
  %v118 = vunpack.c.l.b16 %v38
  %v119 = vunpack.c.l.b16 %v39
  %v120 = vunpack.c.l.b16 %v40
  %v121 = vunpack.c.l.b16 %v41
  %v122 = vunpack.c.l.b16 %v42
  %v123 = vunpack.c.l.b16 %v43
  %v124 = vunpack.c.l.b16 %v44
  %v125 = vunpack.c.l.b16 %v45
  %v126 = vpack.c.b16 %v111, %v110
  %v127 = vpack.c.b16 %v113, %v112
  %v128 = vpack.c.b16 %v115, %v114
  %v129 = vpack.c.b16 %v117, %v116
  %v130 = vpack.c.b16 %v119, %v118
  %v131 = vpack.c.b16 %v121, %v120
  %v132 = vpack.c.b16 %v123, %v122
  %v133 = vpack.c.b16 %v125, %v124
  %142 = vmatpush.bf16.msra.mxu0 %v133
  %143 = vmatpush.bf16.msra.mxu0 %v132
  %144 = vmatpush.bf16.msra.mxu0 %v131
  %145 = vmatpush.bf16.msra.mxu0 %v130
  %146 = vmatpush.bf16.msra.mxu0 %v129
  %147 = vmatpush.bf16.msra.mxu0 %v128
  %148 = vmatpush.bf16.msra.mxu0 %v127
  %149 = vmatpush.bf16.msra.mxu0 %v126
  %150 = vmatmul.bf16.gmra.mxu0 %v78
  %v151 = vpop.f32.mrf.mxu0
  %v152 = vadd.f32 0.0, %v151
  %v153 = vpop.f32.mrf.mxu0
  %v154 = vadd.f32 0.0, %v153
  %155 = vmatmul.bf16.gmra.mxu0 %v79
  %v156 = vpop.f32.mrf.mxu0
  %v157 = vadd.f32 0.0, %v156
  %v158 = vpop.f32.mrf.mxu0
  %v159 = vadd.f32 0.0, %v158
  %160 = vmatmul.bf16.gmra.mxu0 %v80
  %v161 = vpop.f32.mrf.mxu0
  %v162 = vadd.f32 0.0, %v161
  %v163 = vpop.f32.mrf.mxu0
  %v164 = vadd.f32 0.0, %v163
  %165 = vmatmul.bf16.gmra.mxu0 %v81
  %v166 = vpop.f32.mrf.mxu0
  %v167 = vadd.f32 0.0, %v166
  %v168 = vpop.f32.mrf.mxu0
  %v169 = vadd.f32 0.0, %v168
  %170 = vmatmul.bf16.gmra.mxu0 %v82
  %v171 = vpop.f32.mrf.mxu0
  %v172 = vadd.f32 0.0, %v171
  %v173 = vpop.f32.mrf.mxu0
  %v174 = vadd.f32 0.0, %v173
  %175 = vmatmul.bf16.gmra.mxu0 %v83
  %v176 = vpop.f32.mrf.mxu0
  %v177 = vadd.f32 0.0, %v176
  %v178 = vpop.f32.mrf.mxu0
  %v179 = vadd.f32 0.0, %v178
  %180 = vmatmul.bf16.gmra.mxu0 %v84
  %v181 = vpop.f32.mrf.mxu0
  %v182 = vadd.f32 0.0, %v181
  %v183 = vpop.f32.mrf.mxu0
  %v184 = vadd.f32 0.0, %v183
  %185 = vmatmul.bf16.gmra.mxu0 %v85
  %v186 = vpop.f32.mrf.mxu0
  %v187 = vadd.f32 0.0, %v186
  %v188 = vpop.f32.mrf.mxu0
  %v189 = vadd.f32 0.0, %v188
  %190 = vdwg.mxu0
  %p191 = scmp.eq.s32.totalorder 0, 0
  // Predicated region
  $region14: #{basic_block_forward.2} parent=0 // pred_check
    %p192 = pneg %p191
  $region15: #{basic_block_forward.2} parent=0 // pred_check_branch
    %194 = sbr.rel (%p192) target = $region17
  $region16: #{basic_block_forward.2} parent=0 // pred_region
    %v195 = vld [vmem:[%s2] sm:$0x1]
    %v197 = vperm.slane %v195, 0
    %v199 = vadd.f32 %v152, %v197
    %v200 = vadd.f32 %v154, %v197
    %v201 = vadd.f32 %v157, %v197
    %v202 = vadd.f32 %v159, %v197
    %v203 = vadd.f32 %v162, %v197
    %v204 = vadd.f32 %v164, %v197
    %v205 = vadd.f32 %v167, %v197
    %v206 = vadd.f32 %v169, %v197
    %v207 = vadd.f32 %v172, %v197
    %v208 = vadd.f32 %v174, %v197
    %v209 = vadd.f32 %v177, %v197
    %v210 = vadd.f32 %v179, %v197
    %v211 = vadd.f32 %v182, %v197
    %v212 = vadd.f32 %v184, %v197
    %v213 = vadd.f32 %v187, %v197
    %v214 = vadd.f32 %v189, %v197
    %215 = vst [vmem:[#allocation2] sm:$0xff] %v199
    %216 = vst [vmem:[#allocation2 + $0x8] sm:$0xff] %v200
    %217 = vst [vmem:[#allocation2 + $0x10] sm:$0xff] %v201
    %218 = vst [vmem:[#allocation2 + $0x18] sm:$0xff] %v202
    %219 = vst [vmem:[#allocation2 + $0x20] sm:$0xff] %v203
    %220 = vst [vmem:[#allocation2 + $0x28] sm:$0xff] %v204
    %221 = vst [vmem:[#allocation2 + $0x30] sm:$0xff] %v205
    %222 = vst [vmem:[#allocation2 + $0x38] sm:$0xff] %v206
    %223 = vst [vmem:[#allocation2 + $0x40] sm:$0xff] %v207
    %224 = vst [vmem:[#allocation2 + $0x48] sm:$0xff] %v208
    %225 = vst [vmem:[#allocation2 + $0x50] sm:$0xff] %v209
    %226 = vst [vmem:[#allocation2 + $0x58] sm:$0xff] %v210
    %227 = vst [vmem:[#allocation2 + $0x60] sm:$0xff] %v211
    %228 = vst [vmem:[#allocation2 + $0x68] sm:$0xff] %v212
    %229 = vst [vmem:[#allocation2 + $0x70] sm:$0xff] %v213
    %230 = vst [vmem:[#allocation2 + $0x78] sm:$0xff] %v214
  $region17: #{basic_block_forward.2} parent=0 // pred_fallthru
    _
  %p231 = scmp.gt.s32.totalorder 0, 0
  // Predicated region
  $region18: #{basic_block_forward.2} parent=0 // pred_check
    %p232 = pneg %p231
  $region19: #{basic_block_forward.2} parent=0 // pred_check_branch
    %234 = sbr.rel (%p232) target = $region21
  $region20: #{basic_block_forward.2} parent=0 // pred_region
    %v235 = vld [vmem:[#allocation2] sm:$0xff]
    %v236 = vld [vmem:[#allocation2 + $0x8] sm:$0xff]
    %v237 = vld [vmem:[#allocation2 + $0x10] sm:$0xff]
    %v238 = vld [vmem:[#allocation2 + $0x18] sm:$0xff]
    %v239 = vld [vmem:[#allocation2 + $0x20] sm:$0xff]
    %v240 = vld [vmem:[#allocation2 + $0x28] sm:$0xff]
    %v241 = vld [vmem:[#allocation2 + $0x30] sm:$0xff]
    %v242 = vld [vmem:[#allocation2 + $0x38] sm:$0xff]
    %v243 = vld [vmem:[#allocation2 + $0x40] sm:$0xff]
    %v244 = vld [vmem:[#allocation2 + $0x48] sm:$0xff]
    %v245 = vld [vmem:[#allocation2 + $0x50] sm:$0xff]
    %v246 = vld [vmem:[#allocation2 + $0x58] sm:$0xff]
    %v247 = vld [vmem:[#allocation2 + $0x60] sm:$0xff]
    %v248 = vld [vmem:[#allocation2 + $0x68] sm:$0xff]
    %v249 = vld [vmem:[#allocation2 + $0x70] sm:$0xff]
    %v250 = vld [vmem:[#allocation2 + $0x78] sm:$0xff]
    %v251 = vadd.f32 %v235, %v152
    %v252 = vadd.f32 %v236, %v154
    %v253 = vadd.f32 %v237, %v157
    %v254 = vadd.f32 %v238, %v159
    %v255 = vadd.f32 %v239, %v162
    %v256 = vadd.f32 %v240, %v164
    %v257 = vadd.f32 %v241, %v167
    %v258 = vadd.f32 %v242, %v169
    %v259 = vadd.f32 %v243, %v172
    %v260 = vadd.f32 %v244, %v174
    %v261 = vadd.f32 %v245, %v177
    %v262 = vadd.f32 %v246, %v179
    %v263 = vadd.f32 %v247, %v182
    %v264 = vadd.f32 %v248, %v184
    %v265 = vadd.f32 %v249, %v187
    %v266 = vadd.f32 %v250, %v189
    %267 = vst [vmem:[#allocation2] sm:$0xff] %v251
    %268 = vst [vmem:[#allocation2 + $0x8] sm:$0xff] %v252
    %269 = vst [vmem:[#allocation2 + $0x10] sm:$0xff] %v253
    %270 = vst [vmem:[#allocation2 + $0x18] sm:$0xff] %v254
    %271 = vst [vmem:[#allocation2 + $0x20] sm:$0xff] %v255
    %272 = vst [vmem:[#allocation2 + $0x28] sm:$0xff] %v256
    %273 = vst [vmem:[#allocation2 + $0x30] sm:$0xff] %v257
    %274 = vst [vmem:[#allocation2 + $0x38] sm:$0xff] %v258
    %275 = vst [vmem:[#allocation2 + $0x40] sm:$0xff] %v259
    %276 = vst [vmem:[#allocation2 + $0x48] sm:$0xff] %v260
    %277 = vst [vmem:[#allocation2 + $0x50] sm:$0xff] %v261
    %278 = vst [vmem:[#allocation2 + $0x58] sm:$0xff] %v262
    %279 = vst [vmem:[#allocation2 + $0x60] sm:$0xff] %v263
    %280 = vst [vmem:[#allocation2 + $0x68] sm:$0xff] %v264
    %281 = vst [vmem:[#allocation2 + $0x70] sm:$0xff] %v265
    %282 = vst [vmem:[#allocation2 + $0x78] sm:$0xff] %v266
  $region21: #{basic_block_forward.2} parent=0 // pred_fallthru
    _
  // Predicated region
  $region22: #{basic_block_forward.2} parent=0 // pred_check
    %p283 = pneg %p191
  $region23: #{basic_block_forward.2} parent=0 // pred_check_branch
    %285 = sbr.rel (%p283) target = $region25
  $region24: #{basic_block_forward.2} parent=0 // pred_region
    %v286 = vld [vmem:[#allocation2] sm:$0xff]
    %v287 = vld [vmem:[#allocation2 + $0x8] sm:$0xff]
    %v288 = vld [vmem:[#allocation2 + $0x10] sm:$0xff]
    %v289 = vld [vmem:[#allocation2 + $0x18] sm:$0xff]
    %v290 = vld [vmem:[#allocation2 + $0x20] sm:$0xff]
    %v291 = vld [vmem:[#allocation2 + $0x28] sm:$0xff]
    %v292 = vld [vmem:[#allocation2 + $0x30] sm:$0xff]
    %v293 = vld [vmem:[#allocation2 + $0x38] sm:$0xff]
    %v294 = vld [vmem:[#allocation2 + $0x40] sm:$0xff]
    %v295 = vld [vmem:[#allocation2 + $0x48] sm:$0xff]
    %v296 = vld [vmem:[#allocation2 + $0x50] sm:$0xff]
    %v297 = vld [vmem:[#allocation2 + $0x58] sm:$0xff]
    %v298 = vld [vmem:[#allocation2 + $0x60] sm:$0xff]
    %v299 = vld [vmem:[#allocation2 + $0x68] sm:$0xff]
    %v300 = vld [vmem:[#allocation2 + $0x70] sm:$0xff]
    %v301 = vld [vmem:[#allocation2 + $0x78] sm:$0xff]
    %v302 = vmax.f32 %v286, 0.0
    %v303 = vmax.f32 %v287, 0.0
    %v304 = vmax.f32 %v288, 0.0
    %v305 = vmax.f32 %v289, 0.0
    %v306 = vmax.f32 %v290, 0.0
    %v307 = vmax.f32 %v291, 0.0
    %v308 = vmax.f32 %v292, 0.0
    %v309 = vmax.f32 %v293, 0.0
    %v310 = vmax.f32 %v294, 0.0
    %v311 = vmax.f32 %v295, 0.0
    %v312 = vmax.f32 %v296, 0.0
    %v313 = vmax.f32 %v297, 0.0
    %v314 = vmax.f32 %v298, 0.0
    %v315 = vmax.f32 %v299, 0.0
    %v316 = vmax.f32 %v300, 0.0
    %v317 = vmax.f32 %v301, 0.0
    %v318 = vpack.c.bf16 %v302, %v302
    %v319 = vpack.c.bf16 %v303, %v303
    %v320 = vpack.c.bf16 %v304, %v304
    %v321 = vpack.c.bf16 %v305, %v305
    %v322 = vpack.c.bf16 %v306, %v306
    %v323 = vpack.c.bf16 %v307, %v307
    %v324 = vpack.c.bf16 %v308, %v308
    %v325 = vpack.c.bf16 %v309, %v309
    %v326 = vpack.c.bf16 %v310, %v310
    %v327 = vpack.c.bf16 %v311, %v311
    %v328 = vpack.c.bf16 %v312, %v312
    %v329 = vpack.c.bf16 %v313, %v313
    %v330 = vpack.c.bf16 %v314, %v314
    %v331 = vpack.c.bf16 %v315, %v315
    %v332 = vpack.c.bf16 %v316, %v316
    %v333 = vpack.c.bf16 %v317, %v317
    %334 = vst [vmem:[%s3] sm:$0xf] %v318
    %335 = vst [vmem:[%s3 + $0x4] sm:$0xf] %v319
    %336 = vst [vmem:[%s3 + $0x8] sm:$0xf] %v320
    %337 = vst [vmem:[%s3 + $0xc] sm:$0xf] %v321
    %338 = vst [vmem:[%s3 + $0x10] sm:$0xf] %v322
    %339 = vst [vmem:[%s3 + $0x14] sm:$0xf] %v323
    %340 = vst [vmem:[%s3 + $0x18] sm:$0xf] %v324
    %341 = vst [vmem:[%s3 + $0x1c] sm:$0xf] %v325
    %342 = vst [vmem:[%s3 + $0x20] sm:$0xf] %v326
    %343 = vst [vmem:[%s3 + $0x24] sm:$0xf] %v327
    %344 = vst [vmem:[%s3 + $0x28] sm:$0xf] %v328
    %345 = vst [vmem:[%s3 + $0x2c] sm:$0xf] %v329
    %346 = vst [vmem:[%s3 + $0x30] sm:$0xf] %v330
    %347 = vst [vmem:[%s3 + $0x34] sm:$0xf] %v331
    %348 = vst [vmem:[%s3 + $0x38] sm:$0xf] %v332
    %349 = vst [vmem:[%s3 + $0x3c] sm:$0xf] %v333
  $region25: #{basic_block_forward.2} parent=0 // pred_fallthru
    _
  // Predicated region
  $region26: #{basic_block_forward.2} parent=0 // pred_check
    _
  $region27: #{basic_block_forward.2} parent=0 // pred_check_branch
    %351 = sbr.rel (0) target = $region29
  $region28: #{basic_block_forward.2} parent=0 // pred_region
    _
  $region29: #{basic_block_forward.2} parent=0 // pred_fallthru
    _
  // Predicated region
  $region30: #{basic_block_forward.2} parent=0 // pred_check
    _
  $region31: #{basic_block_forward.2} parent=0 // pred_check_branch
    %353 = sbr.rel (0) target = $region33
  $region32: #{basic_block_forward.2} parent=0 // pred_region
    _
  $region33: #{basic_block_forward.2} parent=0 // pred_fallthru
    _

</llo_original>
